<compile_context>
chip_gen: v6e
topology: v6e:2x2x1
jax: 0.10.0
libtpu: 0.0.40
codegen_flags: <defaults>
</compile_context>

<pallas_src>
import functools
import numpy as np

import jax
import jax.numpy as jnp
from jax import lax
from jax.experimental import pallas as pl
from jax.experimental.pallas import tpu as pltpu


_TARGET_BLOCK_BYTES = 1 << 20    # ~1 MiB per block (double-buffered in+out)
_MATMUL_MAX_LEN = 128            # conv lengths <= this use the banded-matmul path


# ------------------------------ helpers ------------------------------------ #

def _axis_padding(orientation, K):
    """Left/right padding of the conv axis, mirroring filter3D_torch's
    _compute_padding for a 1-D kernel oriented along 'd'/'h'/'w'."""
    half = K // 2
    if orientation == 'h' and K % 2 == 0:
        return max(half - 1, 0), half
    return half, half


def _conv_matrix(kernel, L, pad_l):
    """(L, L) matrix M such that  out_row = in_row @ M  equals the
    replicate-padded 1-D cross-correlation (clamped indices fold the padding
    directly into the matrix)."""
    K = int(kernel.shape[0])
    sel = np.zeros((K, L, L), dtype=np.float32)
    for k in range(K):
        for j in range(L):
            i = min(max(j + k - pad_l, 0), L - 1)
            sel[k, i, j] = 1.0
    return jnp.tensordot(kernel.astype(jnp.float32), jnp.asarray(sel), axes=1)


def _shift_clamped(x, s, axis, L):
    """y[..., j, ...] = x[..., clamp(j + s, 0, L-1), ...]  (static shift s)."""
    if s == 0:
        return x
    if abs(s) >= L:
        idx = 0 if s < 0 else L - 1
        edge = lax.slice_in_dim(x, idx, idx + 1, axis=axis)
        return jnp.concatenate([edge] * L, axis=axis)
    if s > 0:
        body = lax.slice_in_dim(x, s, L, axis=axis)
        edge = lax.slice_in_dim(x, L - 1, L, axis=axis)
        return jnp.concatenate([body] + [edge] * s, axis=axis)
    body = lax.slice_in_dim(x, 0, L + s, axis=axis)
    edge = lax.slice_in_dim(x, 0, 1, axis=axis)
    return jnp.concatenate([edge] * (-s) + [body], axis=axis)


def _pick_row_tile(P, row_bytes, max_rows=2048):
    t = max(1, _TARGET_BLOCK_BYTES // max(1, row_bytes))
    t = min(t, max_rows)
    if t >= P:
        return P                                   # single (full) block
    return max(8, (t // 8) * 8)                    # sublane-aligned tile


def _pick_t_tile(T, L, itemsize):
    t = max(1, _TARGET_BLOCK_BYTES // max(1, L * itemsize))
    if T <= 128 or t >= T:
        return T                                   # full (lane) extent
    return max(128, (min(t, T) // 128) * 128)      # lane-aligned tile


# ------------------------------ kernels ------------------------------------ #

def _matmul_lane_kernel(x_ref, m_ref, o_ref):
    # rows on sublanes, (packed) conv segments on lanes; conv == banded matmul.
    o_ref[...] = jnp.dot(
        x_ref[...].astype(jnp.float32), m_ref[...],
        precision=lax.Precision.HIGHEST,
        preferred_element_type=jnp.float32).astype(o_ref.dtype)


def _matmul_sublane_kernel(x_ref, mt_ref, o_ref):
    # conv axis on sublanes, trailing dims on lanes; out = M^T @ x.
    x = x_ref[0].astype(jnp.float32)
    o_ref[0] = jnp.dot(
        mt_ref[...], x,
        precision=lax.Precision.HIGHEST,
        preferred_element_type=jnp.float32).astype(o_ref.dtype)


def _shift_lane_kernel(kv_ref, x_ref, o_ref, *, K, pad_l, L):
    # conv along the lane axis: load once, cast once, K in-register shifts.
    x = x_ref[...].astype(jnp.float32)
    acc = None
    for k in range(K):
        term = kv_ref[0, k] * _shift_clamped(x, k - pad_l, 1, L)
        acc = term if acc is None else acc + term
    o_ref[...] = acc.astype(o_ref.dtype)


def _shift_sublane_kernel(kv_ref, x_ref, o_ref, *, K, pad_l, L):
    # conv along the sublane axis (trailing dims stay lane-dense).
    x = x_ref[0].astype(jnp.float32)
    acc = None
    for k in range(K):
        term = kv_ref[0, k] * _shift_clamped(x, k - pad_l, 0, L)
        acc = term if acc is None else acc + term
    o_ref[0] = acc.astype(o_ref.dtype)


# --------------------------- pallas_call drivers --------------------------- #

def _conv_last_axis(x2, kernel, K, pad_l):
    """1-D conv along the last axis of a (P, L) slab."""
    P, L = x2.shape
    itemsize = x2.dtype.itemsize

    if L <= _MATMUL_MAX_LEN:
        # Pack G rows per lane row (free reshape) so stores are lane-dense,
        # then do the conv as a block-diagonal banded matmul on the MXU.
        g_max = max(1, _MATMUL_MAX_LEN // L)
        G = 1
        for g in range(min(g_max, P), 0, -1):
            if P % g == 0:
                G = g
                break
        Lp = G * L
        Pp = P // G
        xp = x2.reshape(Pp, Lp)
        M = _conv_matrix(kernel, L, pad_l)
        if G > 1:
            M = jnp.kron(jnp.eye(G, dtype=M.dtype), M)
        row_tile = _pick_row_tile(Pp, Lp * itemsize)
        out = pl.pallas_call(
            _matmul_lane_kernel,
            out_shape=jax.ShapeDtypeStruct((Pp, Lp), x2.dtype),
            grid=(pl.cdiv(Pp, row_tile),),
            in_specs=[pl.BlockSpec((row_tile, Lp), lambda i: (i, 0)),
                      pl.BlockSpec((Lp, Lp), lambda i: (0, 0))],
            out_specs=pl.BlockSpec((row_tile, Lp), lambda i: (i, 0)),
            compiler_params=pltpu.CompilerParams(
                dimension_semantics=("parallel",)),
        )(xp, M)
        return out.reshape(P, L)

    # Large L: already lane-dense; K-tap shift/FMA kernel with fused padding.
    row_tile = _pick_row_tile(P, L * itemsize)
    kv = kernel.reshape(1, K).astype(jnp.float32)
    kern = functools.partial(_shift_lane_kernel, K=K, pad_l=pad_l, L=L)
    return pl.pallas_call(
        kern,
        out_shape=jax.ShapeDtypeStruct((P, L), x2.dtype),
        grid=(pl.cdiv(P, row_tile),),
        in_specs=[pl.BlockSpec(memory_space=pltpu.MemorySpace.SMEM),
                  pl.BlockSpec((row_tile, L), lambda i: (i, 0))],
        out_specs=pl.BlockSpec((row_tile, L), lambda i: (i, 0)),
        compiler_params=pltpu.CompilerParams(
            dimension_semantics=("parallel",)),
    )(kv, x2)


def _conv_middle_axis(x3, kernel, K, pad_l):
    """1-D conv along the middle axis of a (P, L, T) slab (native layout,
    trailing dims stay on the lane dimension -- no transpose)."""
    P, L, T = x3.shape
    itemsize = x3.dtype.itemsize
    t_tile = _pick_t_tile(T, L, itemsize)
    grid = (P, pl.cdiv(T, t_tile))

    if L <= _MATMUL_MAX_LEN:
        MT = _conv_matrix(kernel, L, pad_l).T
        return pl.pallas_call(
            _matmul_sublane_kernel,
            out_shape=jax.ShapeDtypeStruct((P, L, T), x3.dtype),
            grid=grid,
            in_specs=[pl.BlockSpec((1, L, t_tile), lambda i, j: (i, 0, j)),
                      pl.BlockSpec((L, L), lambda i, j: (0, 0))],
            out_specs=pl.BlockSpec((1, L, t_tile), lambda i, j: (i, 0, j)),
            compiler_params=pltpu.CompilerParams(
                dimension_semantics=("parallel", "parallel")),
        )(x3, MT)

    kv = kernel.reshape(1, K).astype(jnp.float32)
    kern = functools.partial(_shift_sublane_kernel, K=K, pad_l=pad_l, L=L)
    return pl.pallas_call(
        kern,
        out_shape=jax.ShapeDtypeStruct((P, L, T), x3.dtype),
        grid=grid,
        in_specs=[pl.BlockSpec(memory_space=pltpu.MemorySpace.SMEM),
                  pl.BlockSpec((1, L, t_tile), lambda i, j: (i, 0, j))],
        out_specs=pl.BlockSpec((1, L, t_tile), lambda i, j: (i, 0, j)),
        compiler_params=pltpu.CompilerParams(
            dimension_semantics=("parallel", "parallel")),
    )(kv, x3)


# ------------------------------- wrapper ------------------------------------ #

def convn_layer_filter3d(input_tensor, kernel, dim):
    """JAX/Pallas equivalent of convn_layer_Filter3D_torch().forward."""
    original_shape = input_tensor.shape
    original_ndim = len(original_shape)

    # torch_get_5D: prepend singleton dims until the tensor is 5-D (B,C,D,H,W)
    x5 = input_tensor.reshape((1,) * (5 - original_ndim) + tuple(original_shape))

    # dim bookkeeping exactly as the PyTorch module
    d = dim
    if d >= 0:
        d = d - original_ndim
    d = 5 - int(abs(d))

    K = int(kernel.shape[0])
    if 2 <= d <= 4:
        axis = d
        orientation = {4: 'w', 3: 'h', 2: 'd'}[d]
    elif d in (0, 1):
        axis = d            # module permutes this axis last -> 'w' orientation
        orientation = 'w'
    else:
        raise ValueError(f"unsupported dim {dim}")

    pad_l, _ = _axis_padding(orientation, K)

    shape5 = x5.shape
    L = shape5[axis]
    P = int(np.prod(shape5[:axis]))
    T = int(np.prod(shape5[axis + 1:]))

    if axis == 4:
        out = _conv_last_axis(x5.reshape(P, L), kernel, K, pad_l)
    else:
        out = _conv_middle_axis(x5.reshape(P, L, T), kernel, K, pad_l)
    out5 = out.reshape(shape5)

    if original_ndim == 3:
        return out5[0, 0]
    if original_ndim == 4:
        return out5[0]
    return out5


# ----------------------------- reference (JAX) ------------------------------ #

def _reference(input_tensor, kernel, dim):
    """Pure-jnp reference with identical glue, conv via explicit shift-sum."""
    original_shape = input_tensor.shape
    original_ndim = len(original_shape)
    x5 = input_tensor.reshape((1,) * (5 - original_ndim) + tuple(original_shape))
    d = dim
    if d >= 0:
        d = d - original_ndim
    d = 5 - int(abs(d))
    K = int(kernel.shape[0])
    if 2 <= d <= 4:
        axis, orientation = d, {4: 'w', 3: 'h', 2: 'd'}[d]
    else:
        axis, orientation = d, 'w'
    pad_l, pad_r = _axis_padding(orientation, K)
    xm = jnp.moveaxis(x5, axis, -1)
    L = xm.shape[-1]
    xp = jnp.pad(xm, [(0, 0)] * 4 + [(pad_l, pad_r)], mode='edge')
    acc = jnp.zeros(xm.shape, dtype=jnp.float32)
    for k in range(K):
        acc = acc + kernel[k].astype(jnp.float32) * xp[..., k:k + L].astype(jnp.float32)
    out5 = jnp.moveaxis(acc.astype(xm.dtype), -1, axis)
    if original_ndim == 3:
        return out5[0, 0]
    if original_ndim == 4:
        return out5[0]
    return out5


# --------------------------------- main ------------------------------------ #

if __name__ == "__main__":
    key = jax.random.PRNGKey(0)
    k1, k2, k3, k4 = jax.random.split(key, 4)

    kernel5 = jnp.array([1.0, 2.0, 4.0, 2.0, 1.0], dtype=jnp.float32) / 10.0
    kernel3 = jnp.array([1.0, 2.0, 1.0], dtype=jnp.float32) / 4.0

    xa = jax.random.normal(k1, (2, 4, 16, 16), dtype=jnp.float32)   # NCHW (spec)
    xb = jax.random.normal(k2, (2, 3, 8, 256), dtype=jnp.float32)   # wide W
    xc = jax.random.normal(k3, (2, 3, 256, 16), dtype=jnp.float32)  # tall H
    xd = jax.random.normal(k4, (4, 16, 32), dtype=jnp.float32)      # 3-D input

    cases = [
        (xa, kernel5, -1),   # W, small L -> packed banded-matmul (lane-dense)
        (xa, kernel5, -2),   # H, small L -> banded-matmul, sublane conv axis
        (xa, kernel5, 1),    # C, small L -> banded-matmul, sublane conv axis
        (xb, kernel5, -1),   # W, L=256   -> in-register shift kernel (lane axis)
        (xc, kernel5, -2),   # H, L=256   -> in-register shift kernel (sublane axis)
        (xd, kernel3, 0),    # conv along the leading dim of a 3-D tensor
    ]

    ok = True
    for x, kern, dim in cases:
        y = jax.block_until_ready(convn_layer_filter3d(x, kern, dim))
        y_ref = _reference(x, kern, dim)
        # tolerance allows for MXU f32 pass decomposition on the matmul path
        if y.shape != y_ref.shape or not jnp.allclose(y, y_ref, atol=2e-3, rtol=2e-3):
            ok = False
            break

    print("KERNEL_OK" if ok else "KERNEL_MISMATCH")
</pallas_src>

<mosaic_0001>
module attributes {stable_mosaic.version = 11 : i64} {
  func.func @_matmul_lane_kernel(%arg0: i32, %arg1: memref<16x128xf32, #tpu.memory_space<vmem>>, %arg2: memref<128x128xf32, #tpu.memory_space<vmem>>, %arg3: memref<16x128xf32, #tpu.memory_space<vmem>>) attributes {dimension_semantics = [#tpu.dimension_semantics<parallel>], iteration_bounds = array<i64: 1>, scalar_prefetch = 0 : i64, scratch_operands = 0 : i64, tpu.core_type = #tpu.core_type<tc>, window_params = [{transform_indices = @transform_0, window_bounds = array<i64: 16, 128>}, {pipeline_mode = #tpu.pipeline_mode<synchronous>, transform_indices = @transform_1, window_bounds = array<i64: 128, 128>}, {transform_indices = @transform_2, window_bounds = array<i64: 16, 128>}]} {
    %c0 = arith.constant 0 : index
    %c0_0 = arith.constant 0 : index
    %0 = vector.load %arg1[%c0, %c0_0] : memref<16x128xf32, #tpu.memory_space<vmem>>, vector<16x128xf32>
    %c0_1 = arith.constant 0 : index
    %c0_2 = arith.constant 0 : index
    %1 = vector.load %arg2[%c0_1, %c0_2] : memref<128x128xf32, #tpu.memory_space<vmem>>, vector<128x128xf32>
    %cst = arith.constant dense<0.000000e+00> : vector<16x128xf32>
    %2 = tpu.matmul %0, %1, %cst {dimension_numbers = #tpu.dot_dimension_numbers<[1], [0], [0], [1], [0, 0, 1, 1], [], []>, precision = #tpu.contract_precision<fp32>} : vector<16x128xf32>, vector<128x128xf32>, vector<16x128xf32> -> vector<16x128xf32>
    %c0_3 = arith.constant 0 : index
    %c0_4 = arith.constant 0 : index
    %3 = vector.load %arg3[%c0_3, %c0_4] : memref<16x128xf32, #tpu.memory_space<vmem>>, vector<16x128xf32>
    tpu.vector_store %arg3[%c0_3, %c0_4], %2 {strides = array<i32>} : memref<16x128xf32, #tpu.memory_space<vmem>>, vector<16x128xf32>,
    return
  }
  func.func @transform_0(%arg0: i32) -> (i32, i32) {
    %c0_i32 = arith.constant 0 : i32
    %c0_i32_0 = arith.constant 0 : i32
    return %arg0, %c0_i32 : i32, i32
  }
  func.func @transform_1(%arg0: i32) -> (i32, i32) {
    %c0_i32 = arith.constant 0 : i32
    %c0_i32_0 = arith.constant 0 : i32
    %c0_i32_1 = arith.constant 0 : i32
    return %c0_i32, %c0_i32_0 : i32, i32
  }
  func.func @transform_2(%arg0: i32) -> (i32, i32) {
    %c0_i32 = arith.constant 0 : i32
    %c0_i32_0 = arith.constant 0 : i32
    return %arg0, %c0_i32 : i32, i32
  }
}

</mosaic_0001>

<llo_original>
// kernel: tpu_custom_call.1
$region0: #{tpu_custom_call.1}
  #allocation0 [shape = 'u32[]', space=smem, size = 0x4, offset = 0x4, fixed_abs, tag = 'smem constant byte address 0x4 - core index']
  #allocation1 [shape = 'u32[144,128]{1,0:T(1,128)}', space=vmem, size = 0x12000, scoped, tag = 'internal scratch']
  %s0 = inlined_call_operand.hbm [shape: f32[16,128], index: 0, kind: input, shape index: {}]
  %s1 = inlined_call_operand.hbm [shape: f32[128,128], index: 1, kind: input, shape index: {}]
  %s2 = inlined_call_operand.hbm [shape: f32[16,128], index: 2, kind: output, shape index: {}]
  %s3 = sld [smem:[#allocation0]]
  $region26: #{tpu_custom_call.1} parent=0
    _
  %s5 = ssub.s32 1, %s3
  %s6 = scalar_select 0, %s5, %s3
  $region1: #{tpu_custom_call.1} parent=0
    #allocation2 [shape = 'u8[8192]{0}', space=vmem, size = 0x2000, scoped, tag = 'input window, operand 0, single buffered']
    #allocation3 [shape = 's32[1]{0}', space=sflag, size = 0x4, scoped, tag = 'scoped memory for tpu_custom_call.1']
    #allocation4 [shape = 's32[1]{0}', space=sflag, size = 0x4, scoped, tag = 'scoped memory for tpu_custom_call.1']
    #allocation5 [shape = 'u8[65536]{0}', space=vmem, size = 0x10000, scoped, tag = 'input window, operand 1, single buffered']
    #allocation6 [shape = 's32[1]{0}', space=sflag, size = 0x4, scoped, tag = 'scoped memory for tpu_custom_call.1']
    #allocation7 [shape = 'u8[8192]{0}', space=vmem, size = 0x2000, scoped, tag = 'output window, operand 0, single buffered']
    %7 = vsyncpa [#allocation3], 0
    %8 = vsyncpa [#allocation6], 0
    %9 = vsyncpa [#allocation4], 0
    // Predicated region
    $region2: #{tpu_custom_call.1} parent=1 // pred_check
      _
    $region3: #{tpu_custom_call.1} parent=1 // pred_check_branch
      %11 = sbr.rel (0) target = $region5
    $region4: #{tpu_custom_call.1} parent=1 // pred_region
      %s13 = ssub.s32 256, 256
      %14 = vsyncadd [#allocation3], %s13
      %s15 = sshll.u32 [#allocation2], 4
      %s16 = int_to_ptr.vmem [resolvable:$true] %s15
      %21 = dma.hbm_to_vmem [thread:$0]  %s0, 256, %s16, [#allocation3], 128, 128, 8
    $region5: #{tpu_custom_call.1} parent=1 // pred_fallthru
      _
    // Predicated region
    $region6: #{tpu_custom_call.1} parent=1 // pred_check
      _
    $region7: #{tpu_custom_call.1} parent=1 // pred_check_branch
      %23 = sbr.rel (0) target = $region9
    $region8: #{tpu_custom_call.1} parent=1 // pred_region
      %s25 = ssub.s32 2048, 2048
      %26 = vsyncadd [#allocation6], %s25
      %s27 = sshll.u32 [#allocation5], 4
      %s28 = int_to_ptr.vmem [resolvable:$true] %s27
      %33 = dma.hbm_to_vmem [thread:$0]  %s1, 2048, %s28, [#allocation6], 128, 128, 8
    $region9: #{tpu_custom_call.1} parent=1 // pred_fallthru
      _
    // Predicated region
    $region10: #{tpu_custom_call.1} parent=1 // pred_check
      _
    $region11: #{tpu_custom_call.1} parent=1 // pred_check_branch
      %35 = sbr.rel (0) target = $region13
    $region12: #{tpu_custom_call.1} parent=1 // pred_region
      %36 = dma.done [#allocation3], 256
    $region13: #{tpu_custom_call.1} parent=1 // pred_fallthru
      _
    // Predicated region
    $region14: #{tpu_custom_call.1} parent=1 // pred_check
      _
    $region15: #{tpu_custom_call.1} parent=1 // pred_check_branch
      %38 = sbr.rel (0) target = $region17
    $region16: #{tpu_custom_call.1} parent=1 // pred_region
      %39 = dma.done [#allocation6], 2048
    $region17: #{tpu_custom_call.1} parent=1 // pred_fallthru
      _
    %v40 = vld [vmem:[#allocation2] sm:$0xff]
    %v41 = vld [vmem:[#allocation2 + $0x8] sm:$0xff]
    %v42 = vld [vmem:[#allocation5] sm:$0xff]
    %v43 = vld [vmem:[#allocation5 + $0x8] sm:$0xff]
    %v44 = vld [vmem:[#allocation5 + $0x10] sm:$0xff]
    %v45 = vld [vmem:[#allocation5 + $0x18] sm:$0xff]
    %v46 = vld [vmem:[#allocation5 + $0x20] sm:$0xff]
    %v47 = vld [vmem:[#allocation5 + $0x28] sm:$0xff]
    %v48 = vld [vmem:[#allocation5 + $0x30] sm:$0xff]
    %v49 = vld [vmem:[#allocation5 + $0x38] sm:$0xff]
    %v50 = vld [vmem:[#allocation5 + $0x40] sm:$0xff]
    %v51 = vld [vmem:[#allocation5 + $0x48] sm:$0xff]
    %v52 = vld [vmem:[#allocation5 + $0x50] sm:$0xff]
    %v53 = vld [vmem:[#allocation5 + $0x58] sm:$0xff]
    %v54 = vld [vmem:[#allocation5 + $0x60] sm:$0xff]
    %v55 = vld [vmem:[#allocation5 + $0x68] sm:$0xff]
    %v56 = vld [vmem:[#allocation5 + $0x70] sm:$0xff]
    %v57 = vld [vmem:[#allocation5 + $0x78] sm:$0xff]
    %58 = vmatprep.subr.mxu0 0.0
    %v59 = vand.u32 %v57, 4294901760
    %60 = vmatpush1.msra.mxu0 %v59
    %61 = vmatprep.subr.mxu0 0.0
    %v62 = vand.u32 %v56, 4294901760
    %63 = vmatpush1.msra.mxu0 %v62
    %64 = vmatprep.subr.mxu0 0.0
    %v65 = vand.u32 %v55, 4294901760
    %66 = vmatpush1.msra.mxu0 %v65
    %67 = vmatprep.subr.mxu0 0.0
    %v68 = vand.u32 %v54, 4294901760
    %69 = vmatpush1.msra.mxu0 %v68
    %70 = vmatprep.subr.mxu0 0.0
    %v71 = vand.u32 %v53, 4294901760
    %72 = vmatpush1.msra.mxu0 %v71
    %73 = vmatprep.subr.mxu0 0.0
    %v74 = vand.u32 %v52, 4294901760
    %75 = vmatpush1.msra.mxu0 %v74
    %76 = vmatprep.subr.mxu0 0.0
    %v77 = vand.u32 %v51, 4294901760
    %78 = vmatpush1.msra.mxu0 %v77
    %79 = vmatprep.subr.mxu0 0.0
    %v80 = vand.u32 %v50, 4294901760
    %81 = vmatpush1.msra.mxu0 %v80
    %82 = vmatprep.subr.mxu0 0.0
    %v83 = vand.u32 %v49, 4294901760
    %84 = vmatpush1.msra.mxu0 %v83
    %85 = vmatprep.subr.mxu0 0.0
    %v86 = vand.u32 %v48, 4294901760
    %87 = vmatpush1.msra.mxu0 %v86
    %88 = vmatprep.subr.mxu0 0.0
    %v89 = vand.u32 %v47, 4294901760
    %90 = vmatpush1.msra.mxu0 %v89
    %91 = vmatprep.subr.mxu0 0.0
    %v92 = vand.u32 %v46, 4294901760
    %93 = vmatpush1.msra.mxu0 %v92
    %94 = vmatprep.subr.mxu0 0.0
    %v95 = vand.u32 %v45, 4294901760
    %96 = vmatpush1.msra.mxu0 %v95
    %97 = vmatprep.subr.mxu0 0.0
    %v98 = vand.u32 %v44, 4294901760
    %99 = vmatpush1.msra.mxu0 %v98
    %100 = vmatprep.subr.mxu0 0.0
    %v101 = vand.u32 %v43, 4294901760
    %102 = vmatpush1.msra.mxu0 %v101
    %103 = vmatprep.subr.mxu0 0.0
    %v104 = vand.u32 %v42, 4294901760
    %105 = vmatpush1.msra.mxu0 %v104
    %106 = vmatprep.subr.mxu0 0.0
    %107 = vmatpush2.msra.mxu0 0.0
    %108 = vmatprep.subr.mxu0 0.0
    %109 = vmatpush2.msra.mxu0 0.0
    %110 = vmatprep.subr.mxu0 0.0
    %111 = vmatpush2.msra.mxu0 0.0
    %112 = vmatprep.subr.mxu0 0.0
    %113 = vmatpush2.msra.mxu0 0.0
    %114 = vmatprep.subr.mxu0 0.0
    %115 = vmatpush2.msra.mxu0 0.0
    %116 = vmatprep.subr.mxu0 0.0
    %117 = vmatpush2.msra.mxu0 0.0
    %118 = vmatprep.subr.mxu0 0.0
    %119 = vmatpush2.msra.mxu0 0.0
    %120 = vmatprep.subr.mxu0 0.0
    %121 = vmatpush2.msra.mxu0 0.0
    %122 = vmatprep.subr.mxu0 0.0
    %123 = vmatpush2.msra.mxu0 0.0
    %124 = vmatprep.subr.mxu0 0.0
    %125 = vmatpush2.msra.mxu0 0.0
    %126 = vmatprep.subr.mxu0 0.0
    %127 = vmatpush2.msra.mxu0 0.0
    %128 = vmatprep.subr.mxu0 0.0
    %129 = vmatpush2.msra.mxu0 0.0
    %130 = vmatprep.subr.mxu0 0.0
    %131 = vmatpush2.msra.mxu0 0.0
    %132 = vmatprep.subr.mxu0 0.0
    %133 = vmatpush2.msra.mxu0 0.0
    %134 = vmatprep.subr.mxu0 0.0
    %135 = vmatpush2.msra.mxu0 0.0
    %136 = vmatprep.subr.mxu0 0.0
    %137 = vmatpush2.msra.mxu0 0.0
    %138 = vmatprep.mubr.f32.mxu0 0.0
    %v139 = vand.u32 %v40, 4294901760
    %v140 = vsub.f32 %v40, %v139
    %v141 = vand.u32 %v140, 4294901760
    %v142 = vsub.f32 %v140, %v141
    %v143 = vand.u32 %v142, 4294901760
    %144 = vmatmul.mubr.f32.gmra.mxu0 %v143
    %v145 = vpop.f32.mrf.mxu0
    %v146 = vadd.f32 0.0, %v145
    %v147 = vpop.f32.mrf.mxu0
    %148 = vmatprep.mubr.f32.mxu0 0.0
    %v149 = vand.u32 %v41, 4294901760
    %v150 = vsub.f32 %v41, %v149
    %v151 = vand.u32 %v150, 4294901760
    %v152 = vsub.f32 %v150, %v151
    %v153 = vand.u32 %v152, 4294901760
    %154 = vmatmul.mubr.f32.gmra.mxu0 %v153
    %v155 = vpop.f32.mrf.mxu0
    %v156 = vadd.f32 0.0, %v155
    %v157 = vpop.f32.mrf.mxu0
    %158 = vdwg.mxu0
    %159 = vmatprep.subr.mxu0 0.0
    %v160 = vand.u32 %v57, 4294901760
    %v161 = vsub.f32 %v57, %v160
    %v162 = vand.u32 %v161, 4294901760
    %v163 = vsub.f32 %v161, %v162
    %v164 = vand.u32 %v163, 4294901760
    %165 = vmatpush1.msra.mxu0 %v164
    %166 = vmatprep.subr.mxu0 0.0
    %v167 = vand.u32 %v56, 4294901760
    %v168 = vsub.f32 %v56, %v167
    %v169 = vand.u32 %v168, 4294901760
    %v170 = vsub.f32 %v168, %v169
    %v171 = vand.u32 %v170, 4294901760
    %172 = vmatpush1.msra.mxu0 %v171
    %173 = vmatprep.subr.mxu0 0.0
    %v174 = vand.u32 %v55, 4294901760
    %v175 = vsub.f32 %v55, %v174
    %v176 = vand.u32 %v175, 4294901760
    %v177 = vsub.f32 %v175, %v176
    %v178 = vand.u32 %v177, 4294901760
    %179 = vmatpush1.msra.mxu0 %v178
    %180 = vmatprep.subr.mxu0 0.0
    %v181 = vand.u32 %v54, 4294901760
    %v182 = vsub.f32 %v54, %v181
    %v183 = vand.u32 %v182, 4294901760
    %v184 = vsub.f32 %v182, %v183
    %v185 = vand.u32 %v184, 4294901760
    %186 = vmatpush1.msra.mxu0 %v185
    %187 = vmatprep.subr.mxu0 0.0
    %v188 = vand.u32 %v53, 4294901760
    %v189 = vsub.f32 %v53, %v188
    %v190 = vand.u32 %v189, 4294901760
    %v191 = vsub.f32 %v189, %v190
    %v192 = vand.u32 %v191, 4294901760
    %193 = vmatpush1.msra.mxu0 %v192
    %194 = vmatprep.subr.mxu0 0.0
    %v195 = vand.u32 %v52, 4294901760
    %v196 = vsub.f32 %v52, %v195
    %v197 = vand.u32 %v196, 4294901760
    %v198 = vsub.f32 %v196, %v197
    %v199 = vand.u32 %v198, 4294901760
    %200 = vmatpush1.msra.mxu0 %v199
    %201 = vmatprep.subr.mxu0 0.0
    %v202 = vand.u32 %v51, 4294901760
    %v203 = vsub.f32 %v51, %v202
    %v204 = vand.u32 %v203, 4294901760
    %v205 = vsub.f32 %v203, %v204
    %v206 = vand.u32 %v205, 4294901760
    %207 = vmatpush1.msra.mxu0 %v206
    %208 = vmatprep.subr.mxu0 0.0
    %v209 = vand.u32 %v50, 4294901760
    %v210 = vsub.f32 %v50, %v209
    %v211 = vand.u32 %v210, 4294901760
    %v212 = vsub.f32 %v210, %v211
    %v213 = vand.u32 %v212, 4294901760
    %214 = vmatpush1.msra.mxu0 %v213
    %215 = vmatprep.subr.mxu0 0.0
    %v216 = vand.u32 %v49, 4294901760
    %v217 = vsub.f32 %v49, %v216
    %v218 = vand.u32 %v217, 4294901760
    %v219 = vsub.f32 %v217, %v218
    %v220 = vand.u32 %v219, 4294901760
    %221 = vmatpush1.msra.mxu0 %v220
    %222 = vmatprep.subr.mxu0 0.0
    %v223 = vand.u32 %v48, 4294901760
    %v224 = vsub.f32 %v48, %v223
    %v225 = vand.u32 %v224, 4294901760
    %v226 = vsub.f32 %v224, %v225
    %v227 = vand.u32 %v226, 4294901760
    %228 = vmatpush1.msra.mxu0 %v227
    %229 = vmatprep.subr.mxu0 0.0
    %v230 = vand.u32 %v47, 4294901760
    %v231 = vsub.f32 %v47, %v230
    %v232 = vand.u32 %v231, 4294901760
    %v233 = vsub.f32 %v231, %v232
    %v234 = vand.u32 %v233, 4294901760
    %235 = vmatpush1.msra.mxu0 %v234
    %236 = vmatprep.subr.mxu0 0.0
    %v237 = vand.u32 %v46, 4294901760
    %v238 = vsub.f32 %v46, %v237
    %v239 = vand.u32 %v238, 4294901760
    %v240 = vsub.f32 %v238, %v239
    %v241 = vand.u32 %v240, 4294901760
    %242 = vmatpush1.msra.mxu0 %v241
    %243 = vmatprep.subr.mxu0 0.0
    %v244 = vand.u32 %v45, 4294901760
    %v245 = vsub.f32 %v45, %v244
    %v246 = vand.u32 %v245, 4294901760
    %v247 = vsub.f32 %v245, %v246
    %v248 = vand.u32 %v247, 4294901760
    %249 = vmatpush1.msra.mxu0 %v248
    %250 = vmatprep.subr.mxu0 0.0
    %v251 = vand.u32 %v44, 4294901760
    %v252 = vsub.f32 %v44, %v251
    %v253 = vand.u32 %v252, 4294901760
    %v254 = vsub.f32 %v252, %v253
    %v255 = vand.u32 %v254, 4294901760
    %256 = vmatpush1.msra.mxu0 %v255
    %257 = vmatprep.subr.mxu0 0.0
    %v258 = vand.u32 %v43, 4294901760
    %v259 = vsub.f32 %v43, %v258
    %v260 = vand.u32 %v259, 4294901760
    %v261 = vsub.f32 %v259, %v260
    %v262 = vand.u32 %v261, 4294901760
    %263 = vmatpush1.msra.mxu0 %v262
    %264 = vmatprep.subr.mxu0 0.0
    %v265 = vand.u32 %v42, 4294901760
    %v266 = vsub.f32 %v42, %v265
    %v267 = vand.u32 %v266, 4294901760
    %v268 = vsub.f32 %v266, %v267
    %v269 = vand.u32 %v268, 4294901760
    %270 = vmatpush1.msra.mxu0 %v269
    %271 = vmatprep.subr.mxu0 0.0
    %272 = vmatpush2.msra.mxu0 0.0
    %273 = vmatprep.subr.mxu0 0.0
    %274 = vmatpush2.msra.mxu0 0.0
    %275 = vmatprep.subr.mxu0 0.0
    %276 = vmatpush2.msra.mxu0 0.0
    %277 = vmatprep.subr.mxu0 0.0
    %278 = vmatpush2.msra.mxu0 0.0
    %279 = vmatprep.subr.mxu0 0.0
    %280 = vmatpush2.msra.mxu0 0.0
    %281 = vmatprep.subr.mxu0 0.0
    %282 = vmatpush2.msra.mxu0 0.0
    %283 = vmatprep.subr.mxu0 0.0
    %284 = vmatpush2.msra.mxu0 0.0
    %285 = vmatprep.subr.mxu0 0.0
    %286 = vmatpush2.msra.mxu0 0.0
    %287 = vmatprep.subr.mxu0 0.0
    %288 = vmatpush2.msra.mxu0 0.0
    %289 = vmatprep.subr.mxu0 0.0
    %290 = vmatpush2.msra.mxu0 0.0
    %291 = vmatprep.subr.mxu0 0.0
    %292 = vmatpush2.msra.mxu0 0.0
    %293 = vmatprep.subr.mxu0 0.0
    %294 = vmatpush2.msra.mxu0 0.0
    %295 = vmatprep.subr.mxu0 0.0
    %296 = vmatpush2.msra.mxu0 0.0
    %297 = vmatprep.subr.mxu0 0.0
    %298 = vmatpush2.msra.mxu0 0.0
    %299 = vmatprep.subr.mxu0 0.0
    %300 = vmatpush2.msra.mxu0 0.0
    %301 = vmatprep.subr.mxu0 0.0
    %302 = vmatpush2.msra.mxu0 0.0
    %303 = vmatprep.mubr.f32.mxu0 0.0
    %v304 = vand.u32 %v40, 4294901760
    %305 = vmatmul.mubr.f32.gmra.mxu0 %v304
    %v306 = vpop.f32.mrf.mxu0
    %v307 = vadd.f32 %v146, %v306
    %v308 = vpop.f32.mrf.mxu0
    %309 = vmatprep.mubr.f32.mxu0 0.0
    %v310 = vand.u32 %v41, 4294901760
    %311 = vmatmul.mubr.f32.gmra.mxu0 %v310
    %v312 = vpop.f32.mrf.mxu0
    %v313 = vadd.f32 %v156, %v312
    %v314 = vpop.f32.mrf.mxu0
    %315 = vdwg.mxu0
    %316 = vmatprep.subr.mxu0 0.0
    %v317 = vand.u32 %v57, 4294901760
    %v318 = vsub.f32 %v57, %v317
    %319 = vmatpush1.msra.mxu0 %v318
    %320 = vmatprep.subr.mxu0 0.0
    %v321 = vand.u32 %v56, 4294901760
    %v322 = vsub.f32 %v56, %v321
    %323 = vmatpush1.msra.mxu0 %v322
    %324 = vmatprep.subr.mxu0 0.0
    %v325 = vand.u32 %v55, 4294901760
    %v326 = vsub.f32 %v55, %v325
    %327 = vmatpush1.msra.mxu0 %v326
    %328 = vmatprep.subr.mxu0 0.0
    %v329 = vand.u32 %v54, 4294901760
    %v330 = vsub.f32 %v54, %v329
    %331 = vmatpush1.msra.mxu0 %v330
    %332 = vmatprep.subr.mxu0 0.0
    %v333 = vand.u32 %v53, 4294901760
    %v334 = vsub.f32 %v53, %v333
    %335 = vmatpush1.msra.mxu0 %v334
    %336 = vmatprep.subr.mxu0 0.0
    %v337 = vand.u32 %v52, 4294901760
    %v338 = vsub.f32 %v52, %v337
    %339 = vmatpush1.msra.mxu0 %v338
    %340 = vmatprep.subr.mxu0 0.0
    %v341 = vand.u32 %v51, 4294901760
    %v342 = vsub.f32 %v51, %v341
    %343 = vmatpush1.msra.mxu0 %v342
    %344 = vmatprep.subr.mxu0 0.0
    %v345 = vand.u32 %v50, 4294901760
    %v346 = vsub.f32 %v50, %v345
    %347 = vmatpush1.msra.mxu0 %v346
    %348 = vmatprep.subr.mxu0 0.0
    %v349 = vand.u32 %v49, 4294901760
    %v350 = vsub.f32 %v49, %v349
    %351 = vmatpush1.msra.mxu0 %v350
    %352 = vmatprep.subr.mxu0 0.0
    %v353 = vand.u32 %v48, 4294901760
    %v354 = vsub.f32 %v48, %v353
    %355 = vmatpush1.msra.mxu0 %v354
    %356 = vmatprep.subr.mxu0 0.0
    %v357 = vand.u32 %v47, 4294901760
    %v358 = vsub.f32 %v47, %v357
    %359 = vmatpush1.msra.mxu0 %v358
    %360 = vmatprep.subr.mxu0 0.0
    %v361 = vand.u32 %v46, 4294901760
    %v362 = vsub.f32 %v46, %v361
    %363 = vmatpush1.msra.mxu0 %v362
    %364 = vmatprep.subr.mxu0 0.0
    %v365 = vand.u32 %v45, 4294901760
    %v366 = vsub.f32 %v45, %v365
    %367 = vmatpush1.msra.mxu0 %v366
    %368 = vmatprep.subr.mxu0 0.0
    %v369 = vand.u32 %v44, 4294901760
    %v370 = vsub.f32 %v44, %v369
    %371 = vmatpush1.msra.mxu0 %v370
    %372 = vmatprep.subr.mxu0 0.0
    %v373 = vand.u32 %v43, 4294901760
    %v374 = vsub.f32 %v43, %v373
    %375 = vmatpush1.msra.mxu0 %v374
    %376 = vmatprep.subr.mxu0 0.0
    %v377 = vand.u32 %v42, 4294901760
    %v378 = vsub.f32 %v42, %v377
    %379 = vmatpush1.msra.mxu0 %v378
    %380 = vmatprep.subr.mxu0 0.0
    %381 = vmatpush2.msra.mxu0 0.0
    %382 = vmatprep.subr.mxu0 0.0
    %383 = vmatpush2.msra.mxu0 0.0
    %384 = vmatprep.subr.mxu0 0.0
    %385 = vmatpush2.msra.mxu0 0.0
    %386 = vmatprep.subr.mxu0 0.0
    %387 = vmatpush2.msra.mxu0 0.0
    %388 = vmatprep.subr.mxu0 0.0
    %389 = vmatpush2.msra.mxu0 0.0
    %390 = vmatprep.subr.mxu0 0.0
    %391 = vmatpush2.msra.mxu0 0.0
    %392 = vmatprep.subr.mxu0 0.0
    %393 = vmatpush2.msra.mxu0 0.0
    %394 = vmatprep.subr.mxu0 0.0
    %395 = vmatpush2.msra.mxu0 0.0
    %396 = vmatprep.subr.mxu0 0.0
    %397 = vmatpush2.msra.mxu0 0.0
    %398 = vmatprep.subr.mxu0 0.0
    %399 = vmatpush2.msra.mxu0 0.0
    %400 = vmatprep.subr.mxu0 0.0
    %401 = vmatpush2.msra.mxu0 0.0
    %402 = vmatprep.subr.mxu0 0.0
    %403 = vmatpush2.msra.mxu0 0.0
    %404 = vmatprep.subr.mxu0 0.0
    %405 = vmatpush2.msra.mxu0 0.0
    %406 = vmatprep.subr.mxu0 0.0
    %407 = vmatpush2.msra.mxu0 0.0
    %408 = vmatprep.subr.mxu0 0.0
    %409 = vmatpush2.msra.mxu0 0.0
    %410 = vmatprep.subr.mxu0 0.0
    %411 = vmatpush2.msra.mxu0 0.0
    %412 = vmatprep.mubr.f32.mxu0 0.0
    %v413 = vand.u32 %v40, 4294901760
    %v414 = vsub.f32 %v40, %v413
    %415 = vmatmul.mubr.f32.gmra.mxu0 %v414
    %v416 = vpop.f32.mrf.mxu0
    %v417 = vadd.f32 %v307, %v416
    %v418 = vpop.f32.mrf.mxu0
    %419 = vmatprep.mubr.f32.mxu0 0.0
    %v420 = vand.u32 %v41, 4294901760
    %v421 = vsub.f32 %v41, %v420
    %422 = vmatmul.mubr.f32.gmra.mxu0 %v421
    %v423 = vpop.f32.mrf.mxu0
    %v424 = vadd.f32 %v313, %v423
    %v425 = vpop.f32.mrf.mxu0
    %426 = vdwg.mxu0
    %427 = vmatprep.subr.mxu0 0.0
    %v428 = vand.u32 %v57, 4294901760
    %429 = vmatpush1.msra.mxu0 %v428
    %430 = vmatprep.subr.mxu0 0.0
    %v431 = vand.u32 %v56, 4294901760
    %432 = vmatpush1.msra.mxu0 %v431
    %433 = vmatprep.subr.mxu0 0.0
    %v434 = vand.u32 %v55, 4294901760
    %435 = vmatpush1.msra.mxu0 %v434
    %436 = vmatprep.subr.mxu0 0.0
    %v437 = vand.u32 %v54, 4294901760
    %438 = vmatpush1.msra.mxu0 %v437
    %439 = vmatprep.subr.mxu0 0.0
    %v440 = vand.u32 %v53, 4294901760
    %441 = vmatpush1.msra.mxu0 %v440
    %442 = vmatprep.subr.mxu0 0.0
    %v443 = vand.u32 %v52, 4294901760
    %444 = vmatpush1.msra.mxu0 %v443
    %445 = vmatprep.subr.mxu0 0.0
    %v446 = vand.u32 %v51, 4294901760
    %447 = vmatpush1.msra.mxu0 %v446
    %448 = vmatprep.subr.mxu0 0.0
    %v449 = vand.u32 %v50, 4294901760
    %450 = vmatpush1.msra.mxu0 %v449
    %451 = vmatprep.subr.mxu0 0.0
    %v452 = vand.u32 %v49, 4294901760
    %453 = vmatpush1.msra.mxu0 %v452
    %454 = vmatprep.subr.mxu0 0.0
    %v455 = vand.u32 %v48, 4294901760
    %456 = vmatpush1.msra.mxu0 %v455
    %457 = vmatprep.subr.mxu0 0.0
    %v458 = vand.u32 %v47, 4294901760
    %459 = vmatpush1.msra.mxu0 %v458
    %460 = vmatprep.subr.mxu0 0.0
    %v461 = vand.u32 %v46, 4294901760
    %462 = vmatpush1.msra.mxu0 %v461
    %463 = vmatprep.subr.mxu0 0.0
    %v464 = vand.u32 %v45, 4294901760
    %465 = vmatpush1.msra.mxu0 %v464
    %466 = vmatprep.subr.mxu0 0.0
    %v467 = vand.u32 %v44, 4294901760
    %468 = vmatpush1.msra.mxu0 %v467
    %469 = vmatprep.subr.mxu0 0.0
    %v470 = vand.u32 %v43, 4294901760
    %471 = vmatpush1.msra.mxu0 %v470
    %472 = vmatprep.subr.mxu0 0.0
    %v473 = vand.u32 %v42, 4294901760
    %474 = vmatpush1.msra.mxu0 %v473
    %475 = vmatprep.subr.mxu0 0.0
    %476 = vmatpush2.msra.mxu0 0.0
    %477 = vmatprep.subr.mxu0 0.0
    %478 = vmatpush2.msra.mxu0 0.0
    %479 = vmatprep.subr.mxu0 0.0
    %480 = vmatpush2.msra.mxu0 0.0
    %481 = vmatprep.subr.mxu0 0.0
    %482 = vmatpush2.msra.mxu0 0.0
    %483 = vmatprep.subr.mxu0 0.0
    %484 = vmatpush2.msra.mxu0 0.0
    %485 = vmatprep.subr.mxu0 0.0
    %486 = vmatpush2.msra.mxu0 0.0
    %487 = vmatprep.subr.mxu0 0.0
    %488 = vmatpush2.msra.mxu0 0.0
    %489 = vmatprep.subr.mxu0 0.0
    %490 = vmatpush2.msra.mxu0 0.0
    %491 = vmatprep.subr.mxu0 0.0
    %492 = vmatpush2.msra.mxu0 0.0
    %493 = vmatprep.subr.mxu0 0.0
    %494 = vmatpush2.msra.mxu0 0.0
    %495 = vmatprep.subr.mxu0 0.0
    %496 = vmatpush2.msra.mxu0 0.0
    %497 = vmatprep.subr.mxu0 0.0
    %498 = vmatpush2.msra.mxu0 0.0
    %499 = vmatprep.subr.mxu0 0.0
    %500 = vmatpush2.msra.mxu0 0.0
    %501 = vmatprep.subr.mxu0 0.0
    %502 = vmatpush2.msra.mxu0 0.0
    %503 = vmatprep.subr.mxu0 0.0
    %504 = vmatpush2.msra.mxu0 0.0
    %505 = vmatprep.subr.mxu0 0.0
    %506 = vmatpush2.msra.mxu0 0.0
    %507 = vmatprep.mubr.f32.mxu0 0.0
    %v508 = vand.u32 %v40, 4294901760
    %v509 = vsub.f32 %v40, %v508
    %v510 = vand.u32 %v509, 4294901760
    %511 = vmatmul.mubr.f32.gmra.mxu0 %v510
    %v512 = vpop.f32.mrf.mxu0
    %v513 = vadd.f32 %v417, %v512
    %v514 = vpop.f32.mrf.mxu0
    %515 = vmatprep.mubr.f32.mxu0 0.0
    %v516 = vand.u32 %v41, 4294901760
    %v517 = vsub.f32 %v41, %v516
    %v518 = vand.u32 %v517, 4294901760
    %519 = vmatmul.mubr.f32.gmra.mxu0 %v518
    %v520 = vpop.f32.mrf.mxu0
    %v521 = vadd.f32 %v424, %v520
    %v522 = vpop.f32.mrf.mxu0
    %523 = vdwg.mxu0
    %524 = vmatprep.subr.mxu0 0.0
    %v525 = vand.u32 %v57, 4294901760
    %v526 = vsub.f32 %v57, %v525
    %v527 = vand.u32 %v526, 4294901760
    %528 = vmatpush1.msra.mxu0 %v527
    %529 = vmatprep.subr.mxu0 0.0
    %v530 = vand.u32 %v56, 4294901760
    %v531 = vsub.f32 %v56, %v530
    %v532 = vand.u32 %v531, 4294901760
    %533 = vmatpush1.msra.mxu0 %v532
    %534 = vmatprep.subr.mxu0 0.0
    %v535 = vand.u32 %v55, 4294901760
    %v536 = vsub.f32 %v55, %v535
    %v537 = vand.u32 %v536, 4294901760
    %538 = vmatpush1.msra.mxu0 %v537
    %539 = vmatprep.subr.mxu0 0.0
    %v540 = vand.u32 %v54, 4294901760
    %v541 = vsub.f32 %v54, %v540
    %v542 = vand.u32 %v541, 4294901760
    %543 = vmatpush1.msra.mxu0 %v542
    %544 = vmatprep.subr.mxu0 0.0
    %v545 = vand.u32 %v53, 4294901760
    %v546 = vsub.f32 %v53, %v545
    %v547 = vand.u32 %v546, 4294901760
    %548 = vmatpush1.msra.mxu0 %v547
    %549 = vmatprep.subr.mxu0 0.0
    %v550 = vand.u32 %v52, 4294901760
    %v551 = vsub.f32 %v52, %v550
    %v552 = vand.u32 %v551, 4294901760
    %553 = vmatpush1.msra.mxu0 %v552
    %554 = vmatprep.subr.mxu0 0.0
    %v555 = vand.u32 %v51, 4294901760
    %v556 = vsub.f32 %v51, %v555
    %v557 = vand.u32 %v556, 4294901760
    %558 = vmatpush1.msra.mxu0 %v557
    %559 = vmatprep.subr.mxu0 0.0
    %v560 = vand.u32 %v50, 4294901760
    %v561 = vsub.f32 %v50, %v560
    %v562 = vand.u32 %v561, 4294901760
    %563 = vmatpush1.msra.mxu0 %v562
    %564 = vmatprep.subr.mxu0 0.0
    %v565 = vand.u32 %v49, 4294901760
    %v566 = vsub.f32 %v49, %v565
    %v567 = vand.u32 %v566, 4294901760
    %568 = vmatpush1.msra.mxu0 %v567
    %569 = vmatprep.subr.mxu0 0.0
    %v570 = vand.u32 %v48, 4294901760
    %v571 = vsub.f32 %v48, %v570
    %v572 = vand.u32 %v571, 4294901760
    %573 = vmatpush1.msra.mxu0 %v572
    %574 = vmatprep.subr.mxu0 0.0
    %v575 = vand.u32 %v47, 4294901760
    %v576 = vsub.f32 %v47, %v575
    %v577 = vand.u32 %v576, 4294901760
    %578 = vmatpush1.msra.mxu0 %v577
    %579 = vmatprep.subr.mxu0 0.0
    %v580 = vand.u32 %v46, 4294901760
    %v581 = vsub.f32 %v46, %v580
    %v582 = vand.u32 %v581, 4294901760
    %583 = vmatpush1.msra.mxu0 %v582
    %584 = vmatprep.subr.mxu0 0.0
    %v585 = vand.u32 %v45, 4294901760
    %v586 = vsub.f32 %v45, %v585
    %v587 = vand.u32 %v586, 4294901760
    %588 = vmatpush1.msra.mxu0 %v587
    %589 = vmatprep.subr.mxu0 0.0
    %v590 = vand.u32 %v44, 4294901760
    %v591 = vsub.f32 %v44, %v590
    %v592 = vand.u32 %v591, 4294901760
    %593 = vmatpush1.msra.mxu0 %v592
    %594 = vmatprep.subr.mxu0 0.0
    %v595 = vand.u32 %v43, 4294901760
    %v596 = vsub.f32 %v43, %v595
    %v597 = vand.u32 %v596, 4294901760
    %598 = vmatpush1.msra.mxu0 %v597
    %599 = vmatprep.subr.mxu0 0.0
    %v600 = vand.u32 %v42, 4294901760
    %v601 = vsub.f32 %v42, %v600
    %v602 = vand.u32 %v601, 4294901760
    %603 = vmatpush1.msra.mxu0 %v602
    %604 = vmatprep.subr.mxu0 0.0
    %605 = vmatpush2.msra.mxu0 0.0
    %606 = vmatprep.subr.mxu0 0.0
    %607 = vmatpush2.msra.mxu0 0.0
    %608 = vmatprep.subr.mxu0 0.0
    %609 = vmatpush2.msra.mxu0 0.0
    %610 = vmatprep.subr.mxu0 0.0
    %611 = vmatpush2.msra.mxu0 0.0
    %612 = vmatprep.subr.mxu0 0.0
    %613 = vmatpush2.msra.mxu0 0.0
    %614 = vmatprep.subr.mxu0 0.0
    %615 = vmatpush2.msra.mxu0 0.0
    %616 = vmatprep.subr.mxu0 0.0
    %617 = vmatpush2.msra.mxu0 0.0
    %618 = vmatprep.subr.mxu0 0.0
    %619 = vmatpush2.msra.mxu0 0.0
    %620 = vmatprep.subr.mxu0 0.0
    %621 = vmatpush2.msra.mxu0 0.0
    %622 = vmatprep.subr.mxu0 0.0
    %623 = vmatpush2.msra.mxu0 0.0
    %624 = vmatprep.subr.mxu0 0.0
    %625 = vmatpush2.msra.mxu0 0.0
    %626 = vmatprep.subr.mxu0 0.0
    %627 = vmatpush2.msra.mxu0 0.0
    %628 = vmatprep.subr.mxu0 0.0
    %629 = vmatpush2.msra.mxu0 0.0
    %630 = vmatprep.subr.mxu0 0.0
    %631 = vmatpush2.msra.mxu0 0.0
    %632 = vmatprep.subr.mxu0 0.0
    %633 = vmatpush2.msra.mxu0 0.0
    %634 = vmatprep.subr.mxu0 0.0
    %635 = vmatpush2.msra.mxu0 0.0
    %636 = vmatprep.mubr.f32.mxu0 0.0
    %v637 = vand.u32 %v40, 4294901760
    %638 = vmatmul.mubr.f32.gmra.mxu0 %v637
    %v639 = vpop.f32.mrf.mxu0
    %v640 = vadd.f32 %v513, %v639
    %v641 = vpop.f32.mrf.mxu0
    %642 = vmatprep.mubr.f32.mxu0 0.0
    %v643 = vand.u32 %v41, 4294901760
    %644 = vmatmul.mubr.f32.gmra.mxu0 %v643
    %v645 = vpop.f32.mrf.mxu0
    %v646 = vadd.f32 %v521, %v645
    %v647 = vpop.f32.mrf.mxu0
    %648 = vdwg.mxu0
    %649 = vmatprep.subr.mxu0 0.0
    %v650 = vand.u32 %v57, 4294901760
    %651 = vmatpush1.msra.mxu0 %v650
    %652 = vmatprep.subr.mxu0 0.0
    %v653 = vand.u32 %v56, 4294901760
    %654 = vmatpush1.msra.mxu0 %v653
    %655 = vmatprep.subr.mxu0 0.0
    %v656 = vand.u32 %v55, 4294901760
    %657 = vmatpush1.msra.mxu0 %v656
    %658 = vmatprep.subr.mxu0 0.0
    %v659 = vand.u32 %v54, 4294901760
    %660 = vmatpush1.msra.mxu0 %v659
    %661 = vmatprep.subr.mxu0 0.0
    %v662 = vand.u32 %v53, 4294901760
    %663 = vmatpush1.msra.mxu0 %v662
    %664 = vmatprep.subr.mxu0 0.0
    %v665 = vand.u32 %v52, 4294901760
    %666 = vmatpush1.msra.mxu0 %v665
    %667 = vmatprep.subr.mxu0 0.0
    %v668 = vand.u32 %v51, 4294901760
    %669 = vmatpush1.msra.mxu0 %v668
    %670 = vmatprep.subr.mxu0 0.0
    %v671 = vand.u32 %v50, 4294901760
    %672 = vmatpush1.msra.mxu0 %v671
    %673 = vmatprep.subr.mxu0 0.0
    %v674 = vand.u32 %v49, 4294901760
    %675 = vmatpush1.msra.mxu0 %v674
    %676 = vmatprep.subr.mxu0 0.0
    %v677 = vand.u32 %v48, 4294901760
    %678 = vmatpush1.msra.mxu0 %v677
    %679 = vmatprep.subr.mxu0 0.0
    %v680 = vand.u32 %v47, 4294901760
    %681 = vmatpush1.msra.mxu0 %v680
    %682 = vmatprep.subr.mxu0 0.0
    %v683 = vand.u32 %v46, 4294901760
    %684 = vmatpush1.msra.mxu0 %v683
    %685 = vmatprep.subr.mxu0 0.0
    %v686 = vand.u32 %v45, 4294901760
    %687 = vmatpush1.msra.mxu0 %v686
    %688 = vmatprep.subr.mxu0 0.0
    %v689 = vand.u32 %v44, 4294901760
    %690 = vmatpush1.msra.mxu0 %v689
    %691 = vmatprep.subr.mxu0 0.0
    %v692 = vand.u32 %v43, 4294901760
    %693 = vmatpush1.msra.mxu0 %v692
    %694 = vmatprep.subr.mxu0 0.0
    %v695 = vand.u32 %v42, 4294901760
    %696 = vmatpush1.msra.mxu0 %v695
    %697 = vmatprep.subr.mxu0 0.0
    %698 = vmatpush2.msra.mxu0 0.0
    %699 = vmatprep.subr.mxu0 0.0
    %700 = vmatpush2.msra.mxu0 0.0
    %701 = vmatprep.subr.mxu0 0.0
    %702 = vmatpush2.msra.mxu0 0.0
    %703 = vmatprep.subr.mxu0 0.0
    %704 = vmatpush2.msra.mxu0 0.0
    %705 = vmatprep.subr.mxu0 0.0
    %706 = vmatpush2.msra.mxu0 0.0
    %707 = vmatprep.subr.mxu0 0.0
    %708 = vmatpush2.msra.mxu0 0.0
    %709 = vmatprep.subr.mxu0 0.0
    %710 = vmatpush2.msra.mxu0 0.0
    %711 = vmatprep.subr.mxu0 0.0
    %712 = vmatpush2.msra.mxu0 0.0
    %713 = vmatprep.subr.mxu0 0.0
    %714 = vmatpush2.msra.mxu0 0.0
    %715 = vmatprep.subr.mxu0 0.0
    %716 = vmatpush2.msra.mxu0 0.0
    %717 = vmatprep.subr.mxu0 0.0
    %718 = vmatpush2.msra.mxu0 0.0
    %719 = vmatprep.subr.mxu0 0.0
    %720 = vmatpush2.msra.mxu0 0.0
    %721 = vmatprep.subr.mxu0 0.0
    %722 = vmatpush2.msra.mxu0 0.0
    %723 = vmatprep.subr.mxu0 0.0
    %724 = vmatpush2.msra.mxu0 0.0
    %725 = vmatprep.subr.mxu0 0.0
    %726 = vmatpush2.msra.mxu0 0.0
    %727 = vmatprep.subr.mxu0 0.0
    %728 = vmatpush2.msra.mxu0 0.0
    %729 = vmatprep.mubr.f32.mxu0 0.0
    %v730 = vand.u32 %v40, 4294901760
    %731 = vmatmul.mubr.f32.gmra.mxu0 %v730
    %v732 = vpop.f32.mrf.mxu0
    %v733 = vadd.f32 %v640, %v732
    %v734 = vpop.f32.mrf.mxu0
    %735 = vmatprep.mubr.f32.mxu0 0.0
    %v736 = vand.u32 %v41, 4294901760
    %737 = vmatmul.mubr.f32.gmra.mxu0 %v736
    %v738 = vpop.f32.mrf.mxu0
    %v739 = vadd.f32 %v646, %v738
    %v740 = vpop.f32.mrf.mxu0
    %741 = vdwg.mxu0
    %742 = vst [vmem:[#allocation7] sm:$0xff] %v733
    %743 = vst [vmem:[#allocation7 + $0x8] sm:$0xff] %v739
    // Predicated region
    $region18: #{tpu_custom_call.1} parent=1 // pred_check
      _
    $region19: #{tpu_custom_call.1} parent=1 // pred_check_branch
      %745 = sbr.rel (0) target = $region21
    $region20: #{tpu_custom_call.1} parent=1 // pred_region
      %s747 = ssub.s32 256, 256
      %748 = vsyncadd [#allocation4], %s747
      %s749 = sshll.u32 [#allocation7], 4
      %s750 = int_to_ptr.vmem [resolvable:$true] %s749
      %755 = dma.vmem_to_hbm [thread:$0]  %s750, 256, %s2, [#allocation4], 128, 128, 8
    $region21: #{tpu_custom_call.1} parent=1 // pred_fallthru
      _
    // Predicated region
    $region22: #{tpu_custom_call.1} parent=1 // pred_check
      _
    $region23: #{tpu_custom_call.1} parent=1 // pred_check_branch
      %757 = sbr.rel (0) target = $region25
    $region24: #{tpu_custom_call.1} parent=1 // pred_region
      %758 = dma.done [#allocation4], 256
    $region25: #{tpu_custom_call.1} parent=1 // pred_fallthru
      _
    %759 = vsyncpa [#allocation3], 1
    %760 = vsyncpa [#allocation6], 1
    %761 = vsyncpa [#allocation4], 1

</llo_original>
